<compile_context>
chip_gen: v5e
topology: v5e:2x2
jax: 0.10.0
libtpu: 0.0.40
codegen_flags: <defaults>
</compile_context>

<pallas_src>
import functools

import jax
import jax.numpy as jnp
from jax import lax
from jax.experimental import pallas as pl
from jax.experimental.pallas import tpu as pltpu


def _mha_kernel(q_ref, k_ref, v_ref, wq_ref, wk_ref, wv_ref, wp_ref, bp_ref,
                out_ref, attn_ref, acc_ref, *, scale):
    # grid = (batch, head); head is the innermost (accumulation) axis.
    h = pl.program_id(1)
    n_h = pl.num_programs(1)

    # Per-head projections: column slices of the fused projection, so the total
    # FLOPs over all heads equal the full (N,Dm)x(Dm,HDh) projection.
    qh = jnp.dot(q_ref[0], wq_ref[0],
                 preferred_element_type=jnp.float32) * scale        # (N, Dh)
    kh = jnp.dot(k_ref[0], wk_ref[0],
                 preferred_element_type=jnp.float32)                 # (N, Dh)
    vh = jnp.dot(v_ref[0], wv_ref[0],
                 preferred_element_type=jnp.float32)                 # (N, Dh)

    # Scores: contract the last axes of qh and kh directly -> no kh.T copy.
    s = lax.dot_general(qh, kh, (((1,), (1,)), ((), ())),
                        preferred_element_type=jnp.float32)          # (N, N)

    # Numerically-stable softmax; reciprocal + multiply instead of N*N divides.
    m = jnp.max(s, axis=-1, keepdims=True)
    e = jnp.exp(s - m)
    inv = pl.reciprocal(jnp.sum(e, axis=-1, keepdims=True), approx=False)
    a = e * inv

    # Per-head attention block writeback (1, 1, N, N).
    attn_ref[0, 0] = a.astype(attn_ref.dtype)
    # TODO(synk): attn_drop / proj_drop are identity at the module default p=0.0.

    # Context for this head and its contribution to the output projection:
    # out = sum_h (A_h @ V_h) @ Wp[h*Dh:(h+1)*Dh, :] + b
    ctx = jnp.dot(a, vh, preferred_element_type=jnp.float32)         # (N, Dh)
    head_out = jnp.dot(ctx, wp_ref[0],
                       preferred_element_type=jnp.float32)           # (N, Dm)

    @pl.when(h == 0)
    def _():  # initialize the accumulator with the projection bias (added once)
        acc_ref[...] = jnp.broadcast_to(bp_ref[...],
                                        acc_ref.shape).astype(jnp.float32)

    acc_ref[...] += head_out

    @pl.when(h == n_h - 1)
    def _():
        out_ref[0] = acc_ref[...].astype(out_ref.dtype)


def multi_head_attention(q, k, v, wq, wk, wv, wp, bp, *, n_head, d_head):
    """q,k,v: (B, N, d_model); wq/wk/wv: (d_model, n_head*d_head);
    wp: (n_head*d_head, d_model); bp: (1, d_model)."""
    B, N, Dm = q.shape

    # Per-head weight layout so the kernel only DMAs the slice it needs, and all
    # block shapes cover the full last-two dims (layout plumbing, done by XLA).
    wq3 = wq.reshape(Dm, n_head, d_head).transpose(1, 0, 2)   # (H, Dm, Dh)
    wk3 = wk.reshape(Dm, n_head, d_head).transpose(1, 0, 2)   # (H, Dm, Dh)
    wv3 = wv.reshape(Dm, n_head, d_head).transpose(1, 0, 2)   # (H, Dm, Dh)
    wp3 = wp.reshape(n_head, d_head, Dm)                      # (H, Dh, Dm)

    kernel = functools.partial(_mha_kernel, scale=1.0 / (float(d_head) ** 0.5))

    out_shapes = (
        jax.ShapeDtypeStruct((B, N, Dm), q.dtype),            # out
        jax.ShapeDtypeStruct((B, n_head, N, N), q.dtype),     # attn
    )

    grid_spec = pltpu.PrefetchScalarGridSpec(
        num_scalar_prefetch=0,
        grid=(B, n_head),
        in_specs=[
            pl.BlockSpec((1, N, Dm), lambda b, h: (b, 0, 0)),        # q (reused across h)
            pl.BlockSpec((1, N, Dm), lambda b, h: (b, 0, 0)),        # k
            pl.BlockSpec((1, N, Dm), lambda b, h: (b, 0, 0)),        # v
            pl.BlockSpec((1, Dm, d_head), lambda b, h: (h, 0, 0)),   # wq head slice
            pl.BlockSpec((1, Dm, d_head), lambda b, h: (h, 0, 0)),   # wk head slice
            pl.BlockSpec((1, Dm, d_head), lambda b, h: (h, 0, 0)),   # wv head slice
            pl.BlockSpec((1, d_head, Dm), lambda b, h: (h, 0, 0)),   # wp head slice
            pl.BlockSpec((1, Dm), lambda b, h: (0, 0)),              # proj bias
        ],
        out_specs=[
            pl.BlockSpec((1, N, Dm), lambda b, h: (b, 0, 0)),        # out (acc over h)
            pl.BlockSpec((1, 1, N, N), lambda b, h: (b, h, 0, 0)),   # attn per head
        ],
        scratch_shapes=[pltpu.VMEM((N, Dm), jnp.float32)],           # f32 out accumulator
    )

    return pl.pallas_call(
        kernel,
        out_shape=out_shapes,
        grid_spec=grid_spec,
        compiler_params=pltpu.CompilerParams(
            dimension_semantics=("parallel", "arbitrary"),
            vmem_limit_bytes=48 * 1024 * 1024,   # headroom; safe on v5e/v6e/v7x
        ),
    )(q, k, v, wq3, wk3, wv3, wp3, bp)


def _reference(q, k, v, wq, wk, wv, wp, bp, *, n_head, d_head):
    """Pure-JAX reference mirroring the PyTorch forward."""
    B, N, Dm = q.shape
    qp = (q @ wq).reshape(B, N, n_head, d_head).transpose(0, 2, 1, 3)
    kp = (k @ wk).reshape(B, N, n_head, d_head).transpose(0, 2, 1, 3)
    vp = (v @ wv).reshape(B, N, n_head, d_head).transpose(0, 2, 1, 3)
    attn = jnp.einsum('bhid,bhjd->bhij', qp, kp) / jnp.sqrt(jnp.float32(d_head))
    attn = jax.nn.softmax(attn, axis=-1)
    out = jnp.einsum('bhij,bhjd->bhid', attn, vp)
    out = out.transpose(0, 2, 1, 3).reshape(B, N, n_head * d_head)
    out = out @ wp + bp[0]
    return out, attn


if __name__ == "__main__":
    # Small shapes consistent with the module (scaled down from H=12, Dh=64, Dm=768).
    B, N = 2, 8
    n_head, d_head, d_model = 4, 8, 32
    HDh = n_head * d_head

    key = jax.random.PRNGKey(0)
    kq, kk, kv, kwq, kwk, kwv, kwp = jax.random.split(key, 7)

    q = jax.random.normal(kq, (B, N, d_model), dtype=jnp.float32)
    k = jax.random.normal(kk, (B, N, d_model), dtype=jnp.float32)
    v = jax.random.normal(kv, (B, N, d_model), dtype=jnp.float32)

    # Deterministic synthetic weights (trunc_normal(std=0.02) ~ normal*0.02).
    wq = 0.02 * jax.random.normal(kwq, (d_model, HDh), dtype=jnp.float32)
    wk = 0.02 * jax.random.normal(kwk, (d_model, HDh), dtype=jnp.float32)
    wv = 0.02 * jax.random.normal(kwv, (d_model, HDh), dtype=jnp.float32)
    wp = 0.02 * jax.random.normal(kwp, (HDh, d_model), dtype=jnp.float32)
    bp = jnp.zeros((1, d_model), dtype=jnp.float32)  # nn.init.constant_(bias, 0)

    out, attn = multi_head_attention(q, k, v, wq, wk, wv, wp, bp,
                                     n_head=n_head, d_head=d_head)
    out = jax.block_until_ready(out)
    attn = jax.block_until_ready(attn)

    # Verify against pure-JAX reference.
    out_ref, attn_ref = _reference(q, k, v, wq, wk, wv, wp, bp,
                                   n_head=n_head, d_head=d_head)
    assert out.shape == (B, N, d_model) and attn.shape == (B, n_head, N, N)
    assert jnp.allclose(out, out_ref, atol=1e-5, rtol=1e-5)
    assert jnp.allclose(attn, attn_ref, atol=1e-5, rtol=1e-5)

    print("KERNEL_OK")
</pallas_src>

<mosaic_0001>
module attributes {stable_mosaic.version = 11 : i64} {
  func.func @_mha_kernel(%arg0: i32, %arg1: i32, %arg2: memref<1x8x32xf32, #tpu.memory_space<vmem>>, %arg3: memref<1x8x32xf32, #tpu.memory_space<vmem>>, %arg4: memref<1x8x32xf32, #tpu.memory_space<vmem>>, %arg5: memref<1x32x8xf32, #tpu.memory_space<vmem>>, %arg6: memref<1x32x8xf32, #tpu.memory_space<vmem>>, %arg7: memref<1x32x8xf32, #tpu.memory_space<vmem>>, %arg8: memref<1x8x32xf32, #tpu.memory_space<vmem>>, %arg9: memref<1x32xf32, #tpu.memory_space<vmem>>, %arg10: memref<1x8x32xf32, #tpu.memory_space<vmem>>, %arg11: memref<1x1x8x8xf32, #tpu.memory_space<vmem>>, %arg12: memref<8x32xf32, #tpu.memory_space<vmem>>) attributes {dimension_semantics = [#tpu.dimension_semantics<parallel>, #tpu.dimension_semantics<arbitrary>], iteration_bounds = array<i64: 2, 4>, scalar_prefetch = 0 : i64, scratch_operands = 1 : i64, tpu.core_type = #tpu.core_type<tc>, window_params = [{transform_indices = @transform_0, window_bounds = array<i64: 1, 8, 32>}, {transform_indices = @transform_1, window_bounds = array<i64: 1, 8, 32>}, {transform_indices = @transform_2, window_bounds = array<i64: 1, 8, 32>}, {transform_indices = @transform_3, window_bounds = array<i64: 1, 32, 8>}, {transform_indices = @transform_4, window_bounds = array<i64: 1, 32, 8>}, {transform_indices = @transform_5, window_bounds = array<i64: 1, 32, 8>}, {transform_indices = @transform_6, window_bounds = array<i64: 1, 8, 32>}, {pipeline_mode = #tpu.pipeline_mode<synchronous>, transform_indices = @transform_7, window_bounds = array<i64: 1, 32>}, {transform_indices = @transform_8, window_bounds = array<i64: 1, 8, 32>}, {transform_indices = @transform_9, window_bounds = array<i64: 1, 1, 8, 8>}]} {
    %c0 = arith.constant 0 : index
    %c0_0 = arith.constant 0 : index
    %c0_1 = arith.constant 0 : index
    %0 = vector.load %arg2[%c0, %c0_0, %c0_1] : memref<1x8x32xf32, #tpu.memory_space<vmem>>, vector<1x8x32xf32>
    %1 = vector.shape_cast %0 : vector<1x8x32xf32> to vector<8x32xf32>
    %c0_2 = arith.constant 0 : index
    %c0_3 = arith.constant 0 : index
    %c0_4 = arith.constant 0 : index
    %2 = vector.load %arg5[%c0_2, %c0_3, %c0_4] : memref<1x32x8xf32, #tpu.memory_space<vmem>>, vector<1x32x8xf32>
    %3 = vector.shape_cast %2 : vector<1x32x8xf32> to vector<32x8xf32>
    %cst = arith.constant dense<0.000000e+00> : vector<8x8xf32>
    %4 = tpu.matmul %1, %3, %cst {dimension_numbers = #tpu.dot_dimension_numbers<[1], [0], [0], [1], [0, 0, 1, 1], [], []>} : vector<8x32xf32>, vector<32x8xf32>, vector<8x8xf32> -> vector<8x8xf32>
    %cst_5 = arith.constant 0.353553385 : f32
    %5 = vector.broadcast %cst_5 : f32 to vector<8x8xf32>
    %6 = arith.mulf %4, %5 : vector<8x8xf32>
    %c0_6 = arith.constant 0 : index
    %c0_7 = arith.constant 0 : index
    %c0_8 = arith.constant 0 : index
    %7 = vector.load %arg3[%c0_6, %c0_7, %c0_8] : memref<1x8x32xf32, #tpu.memory_space<vmem>>, vector<1x8x32xf32>
    %8 = vector.shape_cast %7 : vector<1x8x32xf32> to vector<8x32xf32>
    %c0_9 = arith.constant 0 : index
    %c0_10 = arith.constant 0 : index
    %c0_11 = arith.constant 0 : index
    %9 = vector.load %arg6[%c0_9, %c0_10, %c0_11] : memref<1x32x8xf32, #tpu.memory_space<vmem>>, vector<1x32x8xf32>
    %10 = vector.shape_cast %9 : vector<1x32x8xf32> to vector<32x8xf32>
    %cst_12 = arith.constant dense<0.000000e+00> : vector<8x8xf32>
    %11 = tpu.matmul %8, %10, %cst_12 {dimension_numbers = #tpu.dot_dimension_numbers<[1], [0], [0], [1], [0, 0, 1, 1], [], []>} : vector<8x32xf32>, vector<32x8xf32>, vector<8x8xf32> -> vector<8x8xf32>
    %c0_13 = arith.constant 0 : index
    %c0_14 = arith.constant 0 : index
    %c0_15 = arith.constant 0 : index
    %12 = vector.load %arg4[%c0_13, %c0_14, %c0_15] : memref<1x8x32xf32, #tpu.memory_space<vmem>>, vector<1x8x32xf32>
    %13 = vector.shape_cast %12 : vector<1x8x32xf32> to vector<8x32xf32>
    %c0_16 = arith.constant 0 : index
    %c0_17 = arith.constant 0 : index
    %c0_18 = arith.constant 0 : index
    %14 = vector.load %arg7[%c0_16, %c0_17, %c0_18] : memref<1x32x8xf32, #tpu.memory_space<vmem>>, vector<1x32x8xf32>
    %15 = vector.shape_cast %14 : vector<1x32x8xf32> to vector<32x8xf32>
    %cst_19 = arith.constant dense<0.000000e+00> : vector<8x8xf32>
    %16 = tpu.matmul %13, %15, %cst_19 {dimension_numbers = #tpu.dot_dimension_numbers<[1], [0], [0], [1], [0, 0, 1, 1], [], []>} : vector<8x32xf32>, vector<32x8xf32>, vector<8x8xf32> -> vector<8x8xf32>
    %cst_20 = arith.constant dense<0.000000e+00> : vector<8x8xf32>
    %17 = tpu.matmul %6, %11, %cst_20 {dimension_numbers = #tpu.dot_dimension_numbers<[1], [1], [0], [0], [0, 0, 1, 0], [], []>} : vector<8x8xf32>, vector<8x8xf32>, vector<8x8xf32> -> vector<8x8xf32>
    %cst_21 = arith.constant dense<0xFF800000> : vector<8xf32>
    %18 = vector.multi_reduction <maximumf>, %17, %cst_21 [1] : vector<8x8xf32> to vector<8xf32>
    %19 = vector.shape_cast %18 : vector<8xf32> to vector<8x1xf32>
    %20 = vector.broadcast %19 : vector<8x1xf32> to vector<8x8xf32>
    %21 = arith.subf %17, %20 : vector<8x8xf32>
    %22 = math.exp %21 : vector<8x8xf32>
    %cst_22 = arith.constant dense<0.000000e+00> : vector<8xf32>
    %23 = vector.multi_reduction <add>, %22, %cst_22 [1] : vector<8x8xf32> to vector<8xf32>
    %24 = vector.shape_cast %23 : vector<8xf32> to vector<8x1xf32>
    %25 = tpu.reciprocal %24 : vector<8x1xf32> -> vector<8x1xf32>
    %26 = vector.broadcast %25 : vector<8x1xf32> to vector<8x8xf32>
    %27 = arith.mulf %22, %26 : vector<8x8xf32>
    %c0_23 = arith.constant 0 : index
    %c0_24 = arith.constant 0 : index
    %c0_25 = arith.constant 0 : index
    %c0_26 = arith.constant 0 : index
    %28 = vector.load %arg11[%c0_23, %c0_24, %c0_25, %c0_26] : memref<1x1x8x8xf32, #tpu.memory_space<vmem>>, vector<1x1x8x8xf32>
    %29 = vector.shape_cast %28 : vector<1x1x8x8xf32> to vector<8x8xf32>
    %30 = vector.shape_cast %27 : vector<8x8xf32> to vector<1x1x8x8xf32>
    tpu.vector_store %arg11[%c0_23, %c0_24, %c0_25, %c0_26], %30 {strides = array<i32>} : memref<1x1x8x8xf32, #tpu.memory_space<vmem>>, vector<1x1x8x8xf32>,
    %cst_27 = arith.constant dense<0.000000e+00> : vector<8x8xf32>
    %31 = tpu.matmul %27, %16, %cst_27 {dimension_numbers = #tpu.dot_dimension_numbers<[1], [0], [0], [1], [0, 0, 1, 1], [], []>} : vector<8x8xf32>, vector<8x8xf32>, vector<8x8xf32> -> vector<8x8xf32>
    %c0_28 = arith.constant 0 : index
    %c0_29 = arith.constant 0 : index
    %c0_30 = arith.constant 0 : index
    %32 = vector.load %arg8[%c0_28, %c0_29, %c0_30] : memref<1x8x32xf32, #tpu.memory_space<vmem>>, vector<1x8x32xf32>
    %33 = vector.shape_cast %32 : vector<1x8x32xf32> to vector<8x32xf32>
    %cst_31 = arith.constant dense<0.000000e+00> : vector<8x32xf32>
    %34 = tpu.matmul %31, %33, %cst_31 {dimension_numbers = #tpu.dot_dimension_numbers<[1], [0], [0], [1], [0, 0, 1, 1], [], []>} : vector<8x8xf32>, vector<8x32xf32>, vector<8x32xf32> -> vector<8x32xf32>
    %c0_i32 = arith.constant 0 : i32
    %35 = arith.cmpi eq, %arg1, %c0_i32 : i32
    %36 = arith.extui %35 : i1 to i32
    %c0_i32_32 = arith.constant 0 : i32
    %37 = arith.cmpi ne, %36, %c0_i32_32 : i32
    scf.if %37 {
      %c0_38 = arith.constant 0 : index
      %c0_39 = arith.constant 0 : index
      %44 = vector.load %arg9[%c0_38, %c0_39] : memref<1x32xf32, #tpu.memory_space<vmem>>, vector<1x32xf32>
      %45 = vector.shape_cast %44 : vector<1x32xf32> to vector<1x32xf32>
      %46 = vector.broadcast %45 : vector<1x32xf32> to vector<8x32xf32>
      %c0_40 = arith.constant 0 : index
      %c0_41 = arith.constant 0 : index
      %47 = vector.load %arg12[%c0_40, %c0_41] : memref<8x32xf32, #tpu.memory_space<vmem>>, vector<8x32xf32>
      tpu.vector_store %arg12[%c0_40, %c0_41], %46 {strides = array<i32>} : memref<8x32xf32, #tpu.memory_space<vmem>>, vector<8x32xf32>,
    } else {
    }
    %c0_33 = arith.constant 0 : index
    %c0_34 = arith.constant 0 : index
    %38 = vector.load %arg12[%c0_33, %c0_34] : memref<8x32xf32, #tpu.memory_space<vmem>>, vector<8x32xf32>
    %39 = arith.addf %38, %34 : vector<8x32xf32>
    %c0_35 = arith.constant 0 : index
    %c0_36 = arith.constant 0 : index
    %40 = vector.load %arg12[%c0_35, %c0_36] : memref<8x32xf32, #tpu.memory_space<vmem>>, vector<8x32xf32>
    tpu.vector_store %arg12[%c0_35, %c0_36], %39 {strides = array<i32>} : memref<8x32xf32, #tpu.memory_space<vmem>>, vector<8x32xf32>,
    %c3_i32 = arith.constant 3 : i32
    %41 = arith.cmpi eq, %arg1, %c3_i32 : i32
    %42 = arith.extui %41 : i1 to i32
    %c0_i32_37 = arith.constant 0 : i32
    %43 = arith.cmpi ne, %42, %c0_i32_37 : i32
    scf.if %43 {
      %c0_38 = arith.constant 0 : index
      %c0_39 = arith.constant 0 : index
      %44 = vector.load %arg12[%c0_38, %c0_39] : memref<8x32xf32, #tpu.memory_space<vmem>>, vector<8x32xf32>
      %c0_40 = arith.constant 0 : index
      %c0_41 = arith.constant 0 : index
      %c0_42 = arith.constant 0 : index
      %45 = vector.load %arg10[%c0_40, %c0_41, %c0_42] : memref<1x8x32xf32, #tpu.memory_space<vmem>>, vector<1x8x32xf32>
      %46 = vector.shape_cast %45 : vector<1x8x32xf32> to vector<8x32xf32>
      %47 = vector.shape_cast %44 : vector<8x32xf32> to vector<1x8x32xf32>
      tpu.vector_store %arg10[%c0_40, %c0_41, %c0_42], %47 {strides = array<i32>} : memref<1x8x32xf32, #tpu.memory_space<vmem>>, vector<1x8x32xf32>,
    } else {
    }
    return
  }
  func.func @transform_0(%arg0: i32, %arg1: i32) -> (i32, i32, i32) {
    %c0_i32 = arith.constant 0 : i32
    %c0_i32_0 = arith.constant 0 : i32
    %c0_i32_1 = arith.constant 0 : i32
    return %arg0, %c0_i32, %c0_i32_0 : i32, i32, i32
  }
  func.func @transform_1(%arg0: i32, %arg1: i32) -> (i32, i32, i32) {
    %c0_i32 = arith.constant 0 : i32
    %c0_i32_0 = arith.constant 0 : i32
    %c0_i32_1 = arith.constant 0 : i32
    return %arg0, %c0_i32, %c0_i32_0 : i32, i32, i32
  }
  func.func @transform_2(%arg0: i32, %arg1: i32) -> (i32, i32, i32) {
    %c0_i32 = arith.constant 0 : i32
    %c0_i32_0 = arith.constant 0 : i32
    %c0_i32_1 = arith.constant 0 : i32
    return %arg0, %c0_i32, %c0_i32_0 : i32, i32, i32
  }
  func.func @transform_3(%arg0: i32, %arg1: i32) -> (i32, i32, i32) {
    %c0_i32 = arith.constant 0 : i32
    %c0_i32_0 = arith.constant 0 : i32
    %c0_i32_1 = arith.constant 0 : i32
    return %arg1, %c0_i32, %c0_i32_0 : i32, i32, i32
  }
  func.func @transform_4(%arg0: i32, %arg1: i32) -> (i32, i32, i32) {
    %c0_i32 = arith.constant 0 : i32
    %c0_i32_0 = arith.constant 0 : i32
    %c0_i32_1 = arith.constant 0 : i32
    return %arg1, %c0_i32, %c0_i32_0 : i32, i32, i32
  }
  func.func @transform_5(%arg0: i32, %arg1: i32) -> (i32, i32, i32) {
    %c0_i32 = arith.constant 0 : i32
    %c0_i32_0 = arith.constant 0 : i32
    %c0_i32_1 = arith.constant 0 : i32
    return %arg1, %c0_i32, %c0_i32_0 : i32, i32, i32
  }
  func.func @transform_6(%arg0: i32, %arg1: i32) -> (i32, i32, i32) {
    %c0_i32 = arith.constant 0 : i32
    %c0_i32_0 = arith.constant 0 : i32
    %c0_i32_1 = arith.constant 0 : i32
    return %arg1, %c0_i32, %c0_i32_0 : i32, i32, i32
  }
  func.func @transform_7(%arg0: i32, %arg1: i32) -> (i32, i32) {
    %c0_i32 = arith.constant 0 : i32
    %c0_i32_0 = arith.constant 0 : i32
    %c0_i32_1 = arith.constant 0 : i32
    return %c0_i32, %c0_i32_0 : i32, i32
  }
  func.func @transform_8(%arg0: i32, %arg1: i32) -> (i32, i32, i32) {
    %c0_i32 = arith.constant 0 : i32
    %c0_i32_0 = arith.constant 0 : i32
    %c0_i32_1 = arith.constant 0 : i32
    return %arg0, %c0_i32, %c0_i32_0 : i32, i32, i32
  }
  func.func @transform_9(%arg0: i32, %arg1: i32) -> (i32, i32, i32, i32) {
    %c0_i32 = arith.constant 0 : i32
    %c0_i32_0 = arith.constant 0 : i32
    %c0_i32_1 = arith.constant 0 : i32
    return %arg0, %arg1, %c0_i32, %c0_i32_0 : i32, i32, i32, i32
  }
}

</mosaic_0001>

<llo_original>
// kernel: tpu_custom_call.1
$region0: #{tpu_custom_call.1}
  #allocation0 [shape = 'u32[]', space=smem, size = 0x4, offset = 0x4, fixed_abs, tag = 'smem constant byte address 0x4 - core index']
  #allocation1 [shape = 'u32[72,128]{1,0:T(1,128)}', space=vmem, size = 0x9000, scoped, tag = 'internal scratch']
  #allocation2 [shape = 'f32[8,32]{1,0:T(8,128)}', space=vmem, size = 0x1000, scoped, tag = 'scratch operand']
  %s0 = inlined_call_operand.vmem [shape: f32[2,8,32], index: 0, kind: input, shape index: {}]
  %s1 = inlined_call_operand.vmem [shape: f32[2,8,32], index: 1, kind: input, shape index: {}]
  %s2 = inlined_call_operand.vmem [shape: f32[2,8,32], index: 2, kind: input, shape index: {}]
  %s3 = inlined_call_operand.vmem [shape: f32[4,32,8], index: 3, kind: input, shape index: {}]
  %s4 = inlined_call_operand.vmem [shape: f32[4,32,8], index: 4, kind: input, shape index: {}]
  %s5 = inlined_call_operand.vmem [shape: f32[4,32,8], index: 5, kind: input, shape index: {}]
  %s6 = inlined_call_operand.vmem [shape: f32[4,8,32], index: 6, kind: input, shape index: {}]
  %s7 = inlined_call_operand.vmem [shape: f32[1,32], index: 7, kind: input, shape index: {}]
  %s8 = inlined_call_operand.hbm [shape: f32[2,8,32], index: 8, kind: output, shape index: {0}]
  %s9 = inlined_call_operand.hbm [shape: f32[2,4,8,8], index: 9, kind: output, shape index: {1}]
  %10 = xla_tuple %s8, %s9
  %s11 = sld [smem:[#allocation0]]
  $region81: #{tpu_custom_call.1} parent=0
    _
  %s13 = ssub.s32 1, %s11
  %s14 = scalar_select 0, %s13, %s11
  $region1: #{tpu_custom_call.1} parent=0
    #allocation3 [shape = 'u8[8192]{0}', space=vmem, size = 0x2000, scoped, tag = 'output window, operand 0']
    #allocation4 [shape = 's32[2]{0}', space=sflag, size = 0x8, scoped, tag = 'scoped memory for tpu_custom_call.1']
    #allocation5 [shape = 'u8[8192]{0}', space=vmem, size = 0x2000, scoped, tag = 'output window, operand 1']
    #allocation6 [shape = 's32[2]{0}', space=sflag, size = 0x8, scoped, tag = 'scoped memory for tpu_custom_call.1']
    %15 = vsyncpa [#allocation4], 0
    %s16 = scalar_lea.sflag [#allocation4], 1
    %17 = vsyncpa %s16, 0
    %18 = vsyncpa [#allocation6], 0
    %s19 = scalar_lea.sflag [#allocation6], 1
    %20 = vsyncpa %s19, 0
    loop: start=0, step=1, limit=10
    $region2: #{tpu_custom_call.1} parent=1 // loop_pre_header
      _
    $region3: #{tpu_custom_call.1} parent=1 // loop_header
      %s22 = sphi 0, %s26
      %p23 = scmp.ge.s32.totalorder %s22, 10
      %s29 = sphi 0, %s41
      %s30 = sphi 0, %s37
      %s31 = sphi 0, %s29
      %s32 = sphi 0, %s30
      %s33 = sphi 0, %s31
      %s34 = sphi 0, %s32
      %s44 = sphi 0, %s46
      %s47 = sphi 0, %s44
      %s48 = sphi 0, %s47
      %s64 = sphi 0, %s48
      %s70 = sphi 0, %s72
      %s73 = sphi 0, %s70
      %s74 = sphi 0, %s73
      %s90 = sphi 0, %s74
      %s96 = sphi 0, %s98
      %s99 = sphi 0, %s96
      %s100 = sphi 0, %s99
      %s116 = sphi 0, %s100
      %s122 = sphi 0, %s124
      %s125 = sphi 0, %s122
      %s126 = sphi 0, %s125
      %s142 = sphi 0, %s126
      %s148 = sphi 0, %s150
      %s151 = sphi 0, %s148
      %s152 = sphi 0, %s151
      %s168 = sphi 0, %s152
      %s174 = sphi 0, %s176
      %s177 = sphi 0, %s174
      %s178 = sphi 0, %s177
      %s194 = sphi 0, %s178
      %s200 = sphi 0, %s202
      %s203 = sphi 0, %s200
      %s204 = sphi 0, %s203
      %s220 = sphi 0, %s204
      %s224 = sphi 0, %s224
      %s226 = sphi 0, %s224
      %s227 = sphi 0, %s226
      %s241 = sphi 0, %s227
      %s247 = sphi 0, %s249
      %s250 = sphi 0, %s247
      %s251 = sphi 0, %s250
      %s267 = sphi 0, %s251
      %s275 = sphi 0, %s277
      %s278 = sphi 0, %s275
      %s279 = sphi 0, %s278
      %s295 = sphi 0, %s279
    $region4: #{tpu_custom_call.1} parent=1 // loop_header_branch
      %25 = sbr.rel (%p23) target = $region8
    $region5: #{tpu_custom_call.1} parent=1 // loop_body
      %s27 = ssub.s32 %s22, 1
      %s28 = ssub.s32 %s22, 2
      %s35 = sadd.s32 1, %s30
      %p36 = scmp.ge.s32.totalorder %s35, 4
      %s37 = scalar_select %p36, 0, %s35
      %s38 = sadd.s32 1, %s29
      %s39 = scalar_select %p36, %s38, %s29
      %p40 = scmp.ge.s32.totalorder %s39, 2
      %s41 = scalar_select %p40, 0, %s39
      %s42 = ssub.s32 %s29, %s41
      %p43 = scmp.eq.s32.totalorder %s42, 0
      %s45 = sadd.s32 %s44, 1
      %s46 = scalar_select %p43, %s44, %s45
      %p49 = pneg %p43
      %p50 = scmp.eq.s32.totalorder %s22, 7
      %p51 = por %p49, %p50
      %p52 = scmp.ne.s32.totalorder %s44, %s47
      %p53 = scmp.eq.s32.totalorder %s22, 0
      %p54 = por %p52, %p53
      %p55 = scmp.ne.s32.totalorder %s44, %s47
      %p56 = scmp.eq.s32.totalorder %s27, 7
      %p57 = por %p55, %p56
      %p58 = scmp.ne.s32.totalorder %s47, %s48
      %p59 = scmp.eq.s32.totalorder %s27, 0
      %p60 = por %p58, %p59
      %p61 = scmp.ne.s32.totalorder %s47, %s48
      %p62 = scmp.eq.s32.totalorder %s28, 7
      %p63 = por %p61, %p62
      %p65 = scmp.ne.s32.totalorder %s48, %s64
      %p66 = scmp.eq.s32.totalorder %s28, 0
      %p67 = por %p65, %p66
      %s68 = ssub.s32 %s29, %s41
      %p69 = scmp.eq.s32.totalorder %s68, 0
      %s71 = sadd.s32 %s70, 1
      %s72 = scalar_select %p69, %s70, %s71
      %p75 = pneg %p69
      %p76 = scmp.eq.s32.totalorder %s22, 7
      %p77 = por %p75, %p76
      %p78 = scmp.ne.s32.totalorder %s70, %s73
      %p79 = scmp.eq.s32.totalorder %s22, 0
      %p80 = por %p78, %p79
      %p81 = scmp.ne.s32.totalorder %s70, %s73
      %p82 = scmp.eq.s32.totalorder %s27, 7
      %p83 = por %p81, %p82
      %p84 = scmp.ne.s32.totalorder %s73, %s74
      %p85 = scmp.eq.s32.totalorder %s27, 0
      %p86 = por %p84, %p85
      %p87 = scmp.ne.s32.totalorder %s73, %s74
      %p88 = scmp.eq.s32.totalorder %s28, 7
      %p89 = por %p87, %p88
      %p91 = scmp.ne.s32.totalorder %s74, %s90
      %p92 = scmp.eq.s32.totalorder %s28, 0
      %p93 = por %p91, %p92
      %s94 = ssub.s32 %s29, %s41
      %p95 = scmp.eq.s32.totalorder %s94, 0
      %s97 = sadd.s32 %s96, 1
      %s98 = scalar_select %p95, %s96, %s97
      %p101 = pneg %p95
      %p102 = scmp.eq.s32.totalorder %s22, 7
      %p103 = por %p101, %p102
      %p104 = scmp.ne.s32.totalorder %s96, %s99
      %p105 = scmp.eq.s32.totalorder %s22, 0
      %p106 = por %p104, %p105
      %p107 = scmp.ne.s32.totalorder %s96, %s99
      %p108 = scmp.eq.s32.totalorder %s27, 7
      %p109 = por %p107, %p108
      %p110 = scmp.ne.s32.totalorder %s99, %s100
      %p111 = scmp.eq.s32.totalorder %s27, 0
      %p112 = por %p110, %p111
      %p113 = scmp.ne.s32.totalorder %s99, %s100
      %p114 = scmp.eq.s32.totalorder %s28, 7
      %p115 = por %p113, %p114
      %p117 = scmp.ne.s32.totalorder %s100, %s116
      %p118 = scmp.eq.s32.totalorder %s28, 0
      %p119 = por %p117, %p118
      %s120 = ssub.s32 %s30, %s37
      %p121 = scmp.eq.s32.totalorder %s120, 0
      %s123 = sadd.s32 %s122, 1
      %s124 = scalar_select %p121, %s122, %s123
      %p127 = pneg %p121
      %p128 = scmp.eq.s32.totalorder %s22, 7
      %p129 = por %p127, %p128
      %p130 = scmp.ne.s32.totalorder %s122, %s125
      %p131 = scmp.eq.s32.totalorder %s22, 0
      %p132 = por %p130, %p131
      %p133 = scmp.ne.s32.totalorder %s122, %s125
      %p134 = scmp.eq.s32.totalorder %s27, 7
      %p135 = por %p133, %p134
      %p136 = scmp.ne.s32.totalorder %s125, %s126
      %p137 = scmp.eq.s32.totalorder %s27, 0
      %p138 = por %p136, %p137
      %p139 = scmp.ne.s32.totalorder %s125, %s126
      %p140 = scmp.eq.s32.totalorder %s28, 7
      %p141 = por %p139, %p140
      %p143 = scmp.ne.s32.totalorder %s126, %s142
      %p144 = scmp.eq.s32.totalorder %s28, 0
      %p145 = por %p143, %p144
      %s146 = ssub.s32 %s30, %s37
      %p147 = scmp.eq.s32.totalorder %s146, 0
      %s149 = sadd.s32 %s148, 1
      %s150 = scalar_select %p147, %s148, %s149
      %p153 = pneg %p147
      %p154 = scmp.eq.s32.totalorder %s22, 7
      %p155 = por %p153, %p154
      %p156 = scmp.ne.s32.totalorder %s148, %s151
      %p157 = scmp.eq.s32.totalorder %s22, 0
      %p158 = por %p156, %p157
      %p159 = scmp.ne.s32.totalorder %s148, %s151
      %p160 = scmp.eq.s32.totalorder %s27, 7
      %p161 = por %p159, %p160
      %p162 = scmp.ne.s32.totalorder %s151, %s152
      %p163 = scmp.eq.s32.totalorder %s27, 0
      %p164 = por %p162, %p163
      %p165 = scmp.ne.s32.totalorder %s151, %s152
      %p166 = scmp.eq.s32.totalorder %s28, 7
      %p167 = por %p165, %p166
      %p169 = scmp.ne.s32.totalorder %s152, %s168
      %p170 = scmp.eq.s32.totalorder %s28, 0
      %p171 = por %p169, %p170
      %s172 = ssub.s32 %s30, %s37
      %p173 = scmp.eq.s32.totalorder %s172, 0
      %s175 = sadd.s32 %s174, 1
      %s176 = scalar_select %p173, %s174, %s175
      %p179 = pneg %p173
      %p180 = scmp.eq.s32.totalorder %s22, 7
      %p181 = por %p179, %p180
      %p182 = scmp.ne.s32.totalorder %s174, %s177
      %p183 = scmp.eq.s32.totalorder %s22, 0
      %p184 = por %p182, %p183
      %p185 = scmp.ne.s32.totalorder %s174, %s177
      %p186 = scmp.eq.s32.totalorder %s27, 7
      %p187 = por %p185, %p186
      %p188 = scmp.ne.s32.totalorder %s177, %s178
      %p189 = scmp.eq.s32.totalorder %s27, 0
      %p190 = por %p188, %p189
      %p191 = scmp.ne.s32.totalorder %s177, %s178
      %p192 = scmp.eq.s32.totalorder %s28, 7
      %p193 = por %p191, %p192
      %p195 = scmp.ne.s32.totalorder %s178, %s194
      %p196 = scmp.eq.s32.totalorder %s28, 0
      %p197 = por %p195, %p196
      %s198 = ssub.s32 %s30, %s37
      %p199 = scmp.eq.s32.totalorder %s198, 0
      %s201 = sadd.s32 %s200, 1
      %s202 = scalar_select %p199, %s200, %s201
      %p205 = pneg %p199
      %p206 = scmp.eq.s32.totalorder %s22, 7
      %p207 = por %p205, %p206
      %p208 = scmp.ne.s32.totalorder %s200, %s203
      %p209 = scmp.eq.s32.totalorder %s22, 0
      %p210 = por %p208, %p209
      %p211 = scmp.ne.s32.totalorder %s200, %s203
      %p212 = scmp.eq.s32.totalorder %s27, 7
      %p213 = por %p211, %p212
      %p214 = scmp.ne.s32.totalorder %s203, %s204
      %p215 = scmp.eq.s32.totalorder %s27, 0
      %p216 = por %p214, %p215
      %p217 = scmp.ne.s32.totalorder %s203, %s204
      %p218 = scmp.eq.s32.totalorder %s28, 7
      %p219 = por %p217, %p218
      %p221 = scmp.ne.s32.totalorder %s204, %s220
      %p222 = scmp.eq.s32.totalorder %s28, 0
      %p223 = por %p221, %p222
      %s225 = sadd.s32 %s224, 1
      %p228 = scmp.eq.s32.totalorder %s22, 7
      %p229 = scmp.ne.s32.totalorder %s224, %s226
      %p230 = scmp.eq.s32.totalorder %s22, 0
      %p231 = por %p229, %p230
      %p232 = scmp.ne.s32.totalorder %s224, %s226
      %p233 = scmp.eq.s32.totalorder %s27, 7
      %p234 = por %p232, %p233
      %p235 = scmp.ne.s32.totalorder %s226, %s227
      %p236 = scmp.eq.s32.totalorder %s27, 0
      %p237 = por %p235, %p236
      %p238 = scmp.ne.s32.totalorder %s226, %s227
      %p239 = scmp.eq.s32.totalorder %s28, 7
      %p240 = por %p238, %p239
      %p242 = scmp.ne.s32.totalorder %s227, %s241
      %p243 = scmp.eq.s32.totalorder %s28, 0
      %p244 = por %p242, %p243
      %s245 = ssub.s32 %s29, %s41
      %p246 = scmp.eq.s32.totalorder %s245, 0
      %s248 = sadd.s32 %s247, 1
      %s249 = scalar_select %p246, %s247, %s248
      %p252 = pneg %p246
      %p253 = scmp.eq.s32.totalorder %s22, 7
      %p254 = por %p252, %p253
      %p255 = scmp.ne.s32.totalorder %s247, %s250
      %p256 = scmp.eq.s32.totalorder %s22, 0
      %p257 = por %p255, %p256
      %p258 = scmp.ne.s32.totalorder %s247, %s250
      %p259 = scmp.eq.s32.totalorder %s27, 7
      %p260 = por %p258, %p259
      %p261 = scmp.ne.s32.totalorder %s250, %s251
      %p262 = scmp.eq.s32.totalorder %s27, 0
      %p263 = por %p261, %p262
      %p264 = scmp.ne.s32.totalorder %s250, %s251
      %p265 = scmp.eq.s32.totalorder %s28, 7
      %p266 = por %p264, %p265
      %p268 = scmp.ne.s32.totalorder %s251, %s267
      %p269 = scmp.eq.s32.totalorder %s28, 0
      %p270 = por %p268, %p269
      %s271 = ssub.s32 %s29, %s41
      %s272 = ssub.s32 %s30, %s37
      %s273 = sor.u32 %s271, %s272
      %p274 = scmp.eq.s32.totalorder %s273, 0
      %s276 = sadd.s32 %s275, 1
      %s277 = scalar_select %p274, %s275, %s276
      %p280 = pneg %p274
      %p281 = scmp.eq.s32.totalorder %s22, 7
      %p282 = por %p280, %p281
      %p283 = scmp.ne.s32.totalorder %s275, %s278
      %p284 = scmp.eq.s32.totalorder %s22, 0
      %p285 = por %p283, %p284
      %p286 = scmp.ne.s32.totalorder %s275, %s278
      %p287 = scmp.eq.s32.totalorder %s27, 7
      %p288 = por %p286, %p287
      %p289 = scmp.ne.s32.totalorder %s278, %s279
      %p290 = scmp.eq.s32.totalorder %s27, 0
      %p291 = por %p289, %p290
      %p292 = scmp.ne.s32.totalorder %s278, %s279
      %p293 = scmp.eq.s32.totalorder %s28, 7
      %p294 = por %p292, %p293
      %p296 = scmp.ne.s32.totalorder %s279, %s295
      %p297 = scmp.eq.s32.totalorder %s28, 0
      %p298 = por %p296, %p297
      %p299 = scmp.le.s32.totalorder 1, %s22
      %p300 = scmp.lt.s32.totalorder %s22, 9
      %p301 = pnand %p299, %p300
      %p302 = pneg %p301
      // Predicated region
      $region9: #{tpu_custom_call.1} parent=5 // pred_check
        _
      $region10: #{tpu_custom_call.1} parent=5 // pred_check_branch
        %304 = sbr.rel (%p301) target = $region12
      $region11: #{tpu_custom_call.1} parent=5 // pred_region
        %s305 = ssub.s32 %s22, 1
        // Predicated region
        $region13: #{tpu_custom_call.1} parent=11 // pred_check
          %p306 = pneg %p237
        $region14: #{tpu_custom_call.1} parent=11 // pred_check_branch
          %308 = sbr.rel (%p306) target = $region16
        $region15: #{tpu_custom_call.1} parent=11 // pred_region
          _
        $region16: #{tpu_custom_call.1} parent=11 // pred_fallthru
          _
      $region12: #{tpu_custom_call.1} parent=5 // pred_fallthru
        _
      %p309 = scmp.lt.s32.totalorder %s22, 8
      // Predicated region
      $region17: #{tpu_custom_call.1} parent=5 // pred_check
        %p310 = pneg %p309
      $region18: #{tpu_custom_call.1} parent=5 // pred_check_branch
        %312 = sbr.rel (%p310) target = $region20
      $region19: #{tpu_custom_call.1} parent=5 // pred_region
        // Predicated region
        $region21: #{tpu_custom_call.1} parent=19 // pred_check
          %p313 = pneg %p54
        $region22: #{tpu_custom_call.1} parent=19 // pred_check_branch
          %315 = sbr.rel (%p313) target = $region24
        $region23: #{tpu_custom_call.1} parent=19 // pred_region
          %p316 = scmp.lt.s32.totalorder %s29, 1
          %s317 = scalar_select %p316, %s29, 1
          %s318 = smul.addr %s317, 8
          %s319 = scalar_lea.vmem %s0, %s318
        $region24: #{tpu_custom_call.1} parent=19 // pred_fallthru
          _
        // Predicated region
        $region25: #{tpu_custom_call.1} parent=19 // pred_check
          %p320 = pneg %p80
        $region26: #{tpu_custom_call.1} parent=19 // pred_check_branch
          %322 = sbr.rel (%p320) target = $region28
        $region27: #{tpu_custom_call.1} parent=19 // pred_region
          %p323 = scmp.lt.s32.totalorder %s29, 1
          %s324 = scalar_select %p323, %s29, 1
          %s325 = smul.addr %s324, 8
          %s326 = scalar_lea.vmem %s1, %s325
        $region28: #{tpu_custom_call.1} parent=19 // pred_fallthru
          _
        // Predicated region
        $region29: #{tpu_custom_call.1} parent=19 // pred_check
          %p327 = pneg %p106
        $region30: #{tpu_custom_call.1} parent=19 // pred_check_branch
          %329 = sbr.rel (%p327) target = $region32
        $region31: #{tpu_custom_call.1} parent=19 // pred_region
          %p330 = scmp.lt.s32.totalorder %s29, 1
          %s331 = scalar_select %p330, %s29, 1
          %s332 = smul.addr %s331, 8
          %s333 = scalar_lea.vmem %s2, %s332
        $region32: #{tpu_custom_call.1} parent=19 // pred_fallthru
          _
        // Predicated region
        $region33: #{tpu_custom_call.1} parent=19 // pred_check
          %p334 = pneg %p132
        $region34: #{tpu_custom_call.1} parent=19 // pred_check_branch
          %336 = sbr.rel (%p334) target = $region36
        $region35: #{tpu_custom_call.1} parent=19 // pred_region
          %p337 = scmp.lt.s32.totalorder %s30, 3
          %s338 = scalar_select %p337, %s30, 3
          %s339 = smul.addr %s338, 4
          %s340 = smul.addr %s339, 8
          %s341 = scalar_lea.vmem %s3, %s340
        $region36: #{tpu_custom_call.1} parent=19 // pred_fallthru
          _
        // Predicated region
        $region37: #{tpu_custom_call.1} parent=19 // pred_check
          %p342 = pneg %p158
        $region38: #{tpu_custom_call.1} parent=19 // pred_check_branch
          %344 = sbr.rel (%p342) target = $region40
        $region39: #{tpu_custom_call.1} parent=19 // pred_region
          %p345 = scmp.lt.s32.totalorder %s30, 3
          %s346 = scalar_select %p345, %s30, 3
          %s347 = smul.addr %s346, 4
          %s348 = smul.addr %s347, 8
          %s349 = scalar_lea.vmem %s4, %s348
        $region40: #{tpu_custom_call.1} parent=19 // pred_fallthru
          _
        // Predicated region
        $region41: #{tpu_custom_call.1} parent=19 // pred_check
          %p350 = pneg %p184
        $region42: #{tpu_custom_call.1} parent=19 // pred_check_branch
          %352 = sbr.rel (%p350) target = $region44
        $region43: #{tpu_custom_call.1} parent=19 // pred_region
          %p353 = scmp.lt.s32.totalorder %s30, 3
          %s354 = scalar_select %p353, %s30, 3
          %s355 = smul.addr %s354, 4
          %s356 = smul.addr %s355, 8
          %s357 = scalar_lea.vmem %s5, %s356
        $region44: #{tpu_custom_call.1} parent=19 // pred_fallthru
          _
        // Predicated region
        $region45: #{tpu_custom_call.1} parent=19 // pred_check
          %p358 = pneg %p210
        $region46: #{tpu_custom_call.1} parent=19 // pred_check_branch
          %360 = sbr.rel (%p358) target = $region48
        $region47: #{tpu_custom_call.1} parent=19 // pred_region
          %p361 = scmp.lt.s32.totalorder %s30, 3
          %s362 = scalar_select %p361, %s30, 3
          %s363 = smul.addr %s362, 8
          %s364 = scalar_lea.vmem %s6, %s363
        $region48: #{tpu_custom_call.1} parent=19 // pred_fallthru
          _
      $region20: #{tpu_custom_call.1} parent=5 // pred_fallthru
        _
      %p365 = scmp.le.s32.totalorder 1, %s22
      %p366 = scmp.lt.s32.totalorder %s22, 9
      %p367 = pnand %p365, %p366
      %p368 = pneg %p367
      // Predicated region
      $region49: #{tpu_custom_call.1} parent=5 // pred_check
        _
      $region50: #{tpu_custom_call.1} parent=5 // pred_check_branch
        %370 = sbr.rel (%p367) target = $region52
      $region51: #{tpu_custom_call.1} parent=5 // pred_region
        %s371 = ssub.s32 %s22, 1
        %p372 = scmp.lt.s32.totalorder %s31, 1
        %s373 = scalar_select %p372, %s31, 1
        %s374 = smul.addr %s373, 8
        %s375 = scalar_lea.vmem %s0, %s374
        %p376 = pneg %p60
        %p377 = pneg %p57
        %p378 = scmp.lt.s32.totalorder %s31, 1
        %s379 = scalar_select %p378, %s31, 1
        %s380 = smul.addr %s379, 8
        %s381 = scalar_lea.vmem %s1, %s380
        %p382 = pneg %p86
        %p383 = pneg %p83
        %p384 = scmp.lt.s32.totalorder %s31, 1
        %s385 = scalar_select %p384, %s31, 1
        %s386 = smul.addr %s385, 8
        %s387 = scalar_lea.vmem %s2, %s386
        %p388 = pneg %p112
        %p389 = pneg %p109
        %p390 = scmp.lt.s32.totalorder %s32, 3
        %s391 = scalar_select %p390, %s32, 3
        %s392 = smul.addr %s391, 4
        %s393 = smul.addr %s392, 8
        %s394 = scalar_lea.vmem %s3, %s393
        %p395 = pneg %p138
        %p396 = pneg %p135
        %p397 = scmp.lt.s32.totalorder %s32, 3
        %s398 = scalar_select %p397, %s32, 3
        %s399 = smul.addr %s398, 4
        %s400 = smul.addr %s399, 8
        %s401 = scalar_lea.vmem %s4, %s400
        %p402 = pneg %p164
        %p403 = pneg %p161
        %p404 = scmp.lt.s32.totalorder %s32, 3
        %s405 = scalar_select %p404, %s32, 3
        %s406 = smul.addr %s405, 4
        %s407 = smul.addr %s406, 8
        %s408 = scalar_lea.vmem %s5, %s407
        %p409 = pneg %p190
        %p410 = pneg %p187
        %p411 = scmp.lt.s32.totalorder %s32, 3
        %s412 = scalar_select %p411, %s32, 3
        %s413 = smul.addr %s412, 8
        %s414 = scalar_lea.vmem %s6, %s413
        %p415 = pneg %p216
        %p416 = pneg %p213
        %p417 = pneg %p237
        %p418 = pneg %p234
        %p419 = pneg %p263
        %p420 = pneg %p260
        %s421 = sand.u32 %s250, 1
        %s422 = scalar_lea.sflag [#allocation4], %s421
        %s423 = sand.u32 %s250, 1
        %s424 = smul.addr %s423, 8
        %s425 = scalar_lea.vmem [#allocation3], %s424
        %p426 = pneg %p291
        %p427 = pneg %p288
        %s428 = sand.u32 %s278, 1
        %s429 = scalar_lea.sflag [#allocation6], %s428
        %s430 = sand.u32 %s278, 1
        %s431 = smul.addr %s430, 8
        %s432 = scalar_lea.vmem [#allocation5], %s431
        %p433 = scmp.lt.s32.totalorder %s31, 1
        %s434 = scalar_select %p433, %s31, 1
        %s435 = smul.addr %s434, 8
        %s436 = scalar_lea.vmem %s0, %s435
        %p437 = scmp.lt.s32.totalorder %s31, 1
        %s438 = scalar_select %p437, %s31, 1
        %s439 = smul.addr %s438, 8
        %s440 = scalar_lea.vmem %s1, %s439
        %p441 = scmp.lt.s32.totalorder %s31, 1
        %s442 = scalar_select %p441, %s31, 1
        %s443 = smul.addr %s442, 8
        %s444 = scalar_lea.vmem %s2, %s443
        %p445 = scmp.lt.s32.totalorder %s32, 3
        %s446 = scalar_select %p445, %s32, 3
        %s447 = smul.addr %s446, 4
        %s448 = smul.addr %s447, 8
        %s449 = scalar_lea.vmem %s3, %s448
        %p450 = scmp.lt.s32.totalorder %s32, 3
        %s451 = scalar_select %p450, %s32, 3
        %s452 = smul.addr %s451, 4
        %s453 = smul.addr %s452, 8
        %s454 = scalar_lea.vmem %s4, %s453
        %p455 = scmp.lt.s32.totalorder %s32, 3
        %s456 = scalar_select %p455, %s32, 3
        %s457 = smul.addr %s456, 4
        %s458 = smul.addr %s457, 8
        %s459 = scalar_lea.vmem %s5, %s458
        %p460 = scmp.lt.s32.totalorder %s32, 3
        %s461 = scalar_select %p460, %s32, 3
        %s462 = smul.addr %s461, 8
        %s463 = scalar_lea.vmem %s6, %s462
        %v464 = vld [vmem:[%s436] sm:$0xff]
        %v465 = vld [vmem:[%s449] sm:$0xff]
        %v466 = vld [vmem:[%s449 + $0x8] sm:$0xff]
        %v467 = vld [vmem:[%s449 + $0x10] sm:$0xff]
        %v468 = vld [vmem:[%s449 + $0x18] sm:$0xff]
        %vm469 = vcmask 261120
        %v471 = vsel %vm469, %v464, 0
        %473 = vmatpush.msra.mxu0 0.0
        %474 = vmatpush.msra.mxu0 0.0
        %475 = vmatpush.msra.mxu0 0.0
        %476 = vmatpush.msra.mxu0 0.0
        %477 = vmatpush.msra.mxu0 0.0
        %478 = vmatpush.msra.mxu0 0.0
        %479 = vmatpush.msra.mxu0 0.0
        %480 = vmatpush.msra.mxu0 0.0
        %481 = vmatpush.msra.mxu0 0.0
        %482 = vmatpush.msra.mxu0 0.0
        %483 = vmatpush.msra.mxu0 0.0
        %484 = vmatpush.msra.mxu0 0.0
        %485 = vmatpush.msra.mxu0 %v468
        %486 = vmatpush.msra.mxu0 %v467
        %487 = vmatpush.msra.mxu0 %v466
        %488 = vmatpush.msra.mxu0 %v465
        %489 = vmatmul.f32.gmra.mxu0 %v471
        %v490 = vpop.f32.mrf.mxu0
        %v491 = vadd.f32 0.0, %v490
        %492 = vdwg.mxu0
        %v493 = vmul.f32 %v491, 0.35355338
        %v494 = vld [vmem:[%s440] sm:$0xff]
        %v495 = vld [vmem:[%s454] sm:$0xff]
        %v496 = vld [vmem:[%s454 + $0x8] sm:$0xff]
        %v497 = vld [vmem:[%s454 + $0x10] sm:$0xff]
        %v498 = vld [vmem:[%s454 + $0x18] sm:$0xff]
        %v500 = vsel %vm469, %v494, 0
        %502 = vmatpush.msra.mxu0 0.0
        %503 = vmatpush.msra.mxu0 0.0
        %504 = vmatpush.msra.mxu0 0.0
        %505 = vmatpush.msra.mxu0 0.0
        %506 = vmatpush.msra.mxu0 0.0
        %507 = vmatpush.msra.mxu0 0.0
        %508 = vmatpush.msra.mxu0 0.0
        %509 = vmatpush.msra.mxu0 0.0
        %510 = vmatpush.msra.mxu0 0.0
        %511 = vmatpush.msra.mxu0 0.0
        %512 = vmatpush.msra.mxu0 0.0
        %513 = vmatpush.msra.mxu0 0.0
        %514 = vmatpush.msra.mxu0 %v498
        %515 = vmatpush.msra.mxu0 %v497
        %516 = vmatpush.msra.mxu0 %v496
        %517 = vmatpush.msra.mxu0 %v495
        %518 = vmatmul.f32.gmra.mxu0 %v500
        %v519 = vpop.f32.mrf.mxu0
        %v520 = vadd.f32 0.0, %v519
        %521 = vdwg.mxu0
        %v522 = vld [vmem:[%s444] sm:$0xff]
        %v523 = vld [vmem:[%s459] sm:$0xff]
        %v524 = vld [vmem:[%s459 + $0x8] sm:$0xff]
        %v525 = vld [vmem:[%s459 + $0x10] sm:$0xff]
        %v526 = vld [vmem:[%s459 + $0x18] sm:$0xff]
        %v528 = vsel %vm469, %v522, 0
        %530 = vmatpush.msra.mxu0 0.0
        %531 = vmatpush.msra.mxu0 0.0
        %532 = vmatpush.msra.mxu0 0.0
        %533 = vmatpush.msra.mxu0 0.0
        %534 = vmatpush.msra.mxu0 0.0
        %535 = vmatpush.msra.mxu0 0.0
        %536 = vmatpush.msra.mxu0 0.0
        %537 = vmatpush.msra.mxu0 0.0
        %538 = vmatpush.msra.mxu0 0.0
        %539 = vmatpush.msra.mxu0 0.0
        %540 = vmatpush.msra.mxu0 0.0
        %541 = vmatpush.msra.mxu0 0.0
        %542 = vmatpush.msra.mxu0 %v526
        %543 = vmatpush.msra.mxu0 %v525
        %544 = vmatpush.msra.mxu0 %v524
        %545 = vmatpush.msra.mxu0 %v523
        %546 = vmatmul.f32.gmra.mxu0 %v528
        %v547 = vpop.f32.mrf.mxu0
        %v548 = vadd.f32 0.0, %v547
        %549 = vdwg.mxu0
        %vm550 = vcmask 64512
        %v552 = vsel %vm550, %v493, 0
        %v555 = vsel %vm550, %v520, 0
        %557 = vmatpush.xpose.msra.mxu0 0.0
        %558 = vmatpush.xpose.msra.mxu0 0.0
        %559 = vmatpush.xpose.msra.mxu0 0.0
        %560 = vmatpush.xpose.msra.mxu0 0.0
        %561 = vmatpush.xpose.msra.mxu0 0.0
        %562 = vmatpush.xpose.msra.mxu0 0.0
        %563 = vmatpush.xpose.msra.mxu0 0.0
        %564 = vmatpush.xpose.msra.mxu0 0.0
        %565 = vmatpush.xpose.msra.mxu0 0.0
        %566 = vmatpush.xpose.msra.mxu0 0.0
        %567 = vmatpush.xpose.msra.mxu0 0.0
        %568 = vmatpush.xpose.msra.mxu0 0.0
        %569 = vmatpush.xpose.msra.mxu0 0.0
        %570 = vmatpush.xpose.msra.mxu0 0.0
        %571 = vmatpush.xpose.msra.mxu0 0.0
        %572 = vmatpush.xpose.msra.mxu0 %v555
        %573 = vmatmul.f32.gmra.mxu0 %v552
        %v574 = vpop.f32.mrf.mxu0
        %v575 = vadd.f32 0.0, %v574
        %576 = vdwg.mxu0
        %v577 = vsel %vm550, %v575, -inf
        %578 = vmax.xlane.f32.xlu0 %v577
        %v579 = vpop.xlane.xlu0 %578
        %v580 = vsub.f32 %v575, %v579
        %v581 = vmul.f32 %v580, 1.442695
        %v582 = vpow.pop %v581
        %v583 = vsel %vm550, %v582, 0.0
        %584 = vadd.xlane.f32.xlu0 %v583
        %v585 = vpop.xlane.xlu0 %584
        %v586 = vrcp.pop %v585
        %v587 = vmul.f32 %v585, %v586
        %v588 = vsub.f32 1.0, %v587
        %v589 = vmul.f32 %v586, %v588
        %v590 = vadd.f32 %v586, %v589
        %vm591 = vweird.f32 %v585
        %vm592 = vweird.f32 %v586
        %vm593 = vmor %vm591, %vm592
        %v594 = vsel %vm593, %v586, %v590
        %v595 = vand.u32 2147483647, %v585
        %vm596 = vcmp.eq.f32.partialorder %v595, 8.507059e+37
        %v597 = vand.u32 %v585, 2147483648
        %v598 = vor.u32 1.1754944e-38, %v597
        %v599 = vsel %vm596, %v598, %v594
        %v600 = vmul.f32 %v582, %v599
        %601 = vst.msk [vmem:[%s432] sm:$0xff] %vm550, %v600
        %v603 = vsel %vm550, %v600, 0
        %605 = vmatpush.msra.mxu0 0.0
        %606 = vmatpush.msra.mxu0 0.0
        %607 = vmatpush.msra.mxu0 0.0
        %608 = vmatpush.msra.mxu0 0.0
        %609 = vmatpush.msra.mxu0 0.0
        %610 = vmatpush.msra.mxu0 0.0
        %611 = vmatpush.msra.mxu0 0.0
        %612 = vmatpush.msra.mxu0 0.0
        %613 = vmatpush.msra.mxu0 0.0
        %614 = vmatpush.msra.mxu0 0.0
        %615 = vmatpush.msra.mxu0 0.0
        %616 = vmatpush.msra.mxu0 0.0
        %617 = vmatpush.msra.mxu0 0.0
        %618 = vmatpush.msra.mxu0 0.0
        %619 = vmatpush.msra.mxu0 0.0
        %620 = vmatpush.msra.mxu0 %v548
        %621 = vmatmul.f32.gmra.mxu0 %v603
        %v622 = vpop.f32.mrf.mxu0
        %v623 = vadd.f32 0.0, %v622
        %624 = vdwg.mxu0
        %v625 = vld [vmem:[%s463] sm:$0xff]
        %v627 = vsel %vm550, %v623, 0
        %629 = vmatpush.msra.mxu0 0.0
        %630 = vmatpush.msra.mxu0 0.0
        %631 = vmatpush.msra.mxu0 0.0
        %632 = vmatpush.msra.mxu0 0.0
        %633 = vmatpush.msra.mxu0 0.0
        %634 = vmatpush.msra.mxu0 0.0
        %635 = vmatpush.msra.mxu0 0.0
        %636 = vmatpush.msra.mxu0 0.0
        %637 = vmatpush.msra.mxu0 0.0
        %638 = vmatpush.msra.mxu0 0.0
        %639 = vmatpush.msra.mxu0 0.0
        %640 = vmatpush.msra.mxu0 0.0
        %641 = vmatpush.msra.mxu0 0.0
        %642 = vmatpush.msra.mxu0 0.0
        %643 = vmatpush.msra.mxu0 0.0
        %644 = vmatpush.msra.mxu0 %v625
        %645 = vmatmul.f32.gmra.mxu0 %v627
        %v646 = vpop.f32.mrf.mxu0
        %v647 = vadd.f32 0.0, %v646
        %648 = vdwg.mxu0
        %p649 = scmp.eq.s32.totalorder %s32, 0
        // Predicated region
        $region53: #{tpu_custom_call.1} parent=51 // pred_check
          %p650 = pneg %p649
        $region54: #{tpu_custom_call.1} parent=51 // pred_check_branch
          %652 = sbr.rel (%p650) target = $region56
        $region55: #{tpu_custom_call.1} parent=51 // pred_region
          %v653 = vld [vmem:[%s7] sm:$0x1]
          %v655 = vperm.slane %v653, 0
          %657 = vst.msk [vmem:[#allocation2] sm:$0xff] %vm469, %v655
        $region56: #{tpu_custom_call.1} parent=51 // pred_fallthru
          _
        %v658 = vld [vmem:[#allocation2] sm:$0xff]
        %v659 = vadd.f32 %v658, %v647
        %660 = vst.msk [vmem:[#allocation2] sm:$0xff] %vm469, %v659
        %p661 = scmp.eq.s32.totalorder %s32, 3
        // Predicated region
        $region57: #{tpu_custom_call.1} parent=51 // pred_check
          %p662 = pneg %p661
        $region58: #{tpu_custom_call.1} parent=51 // pred_check_branch
          %664 = sbr.rel (%p662) target = $region60
        $region59: #{tpu_custom_call.1} parent=51 // pred_region
          %v665 = vld [vmem:[#allocation2] sm:$0xff]
          %666 = vst.msk [vmem:[%s425] sm:$0xff] %vm469, %v665
        $region60: #{tpu_custom_call.1} parent=51 // pred_fallthru
          _
        %s667 = sand.u32 %s250, 1
        %s668 = scalar_lea.sflag [#allocation4], %s667
        %s669 = sand.u32 %s250, 1
        %s670 = smul.addr %s669, 8
        %s671 = scalar_lea.vmem [#allocation3], %s670
        %s672 = sand.u32 %s278, 1
        %s673 = scalar_lea.sflag [#allocation6], %s672
        %s674 = sand.u32 %s278, 1
        %s675 = smul.addr %s674, 8
        %s676 = scalar_lea.vmem [#allocation5], %s675
        // Predicated region
        $region61: #{tpu_custom_call.1} parent=51 // pred_check
          %p677 = pneg %p260
        $region62: #{tpu_custom_call.1} parent=51 // pred_check_branch
          %679 = sbr.rel (%p677) target = $region64
        $region63: #{tpu_custom_call.1} parent=51 // pred_region
          %681 = vsyncadd %s668, 0
          %s682 = smul.addr %s31, 8
          %s683 = scalar_lea.hbm %s8, %s682
          %s685 = sshll.u32 %s671, 4
          %s686 = int_to_ptr.vmem [resolvable:$true] %s685
          %s687 = sshll.u32 %s683, 4
          %s688 = int_to_ptr.hbm [resolvable:$true] %s687
          %690 = dma.vmem_to_hbm [thread:$0]  %s686, 128, %s688, %s668
        $region64: #{tpu_custom_call.1} parent=51 // pred_fallthru
          _
        // Predicated region
        $region65: #{tpu_custom_call.1} parent=51 // pred_check
          %p691 = pneg %p288
        $region66: #{tpu_custom_call.1} parent=51 // pred_check_branch
          %693 = sbr.rel (%p691) target = $region68
        $region67: #{tpu_custom_call.1} parent=51 // pred_region
          %695 = vsyncadd %s673, 0
          %s696 = smul.addr %s31, 4
          %s697 = sadd.s32 %s32, %s696
          %s698 = smul.addr %s697, 8
          %s699 = scalar_lea.hbm %s9, %s698
          %s701 = sshll.u32 %s676, 4
          %s702 = int_to_ptr.vmem [resolvable:$true] %s701
          %s703 = sshll.u32 %s699, 4
          %s704 = int_to_ptr.hbm [resolvable:$true] %s703
          %706 = dma.vmem_to_hbm [thread:$0]  %s702, 128, %s704, %s673
        $region68: #{tpu_custom_call.1} parent=51 // pred_fallthru
          _
      $region52: #{tpu_custom_call.1} parent=5 // pred_fallthru
        _
      %p707 = scmp.le.s32.totalorder 2, %s22
      // Predicated region
      $region69: #{tpu_custom_call.1} parent=5 // pred_check
        %p708 = pneg %p707
      $region70: #{tpu_custom_call.1} parent=5 // pred_check_branch
        %710 = sbr.rel (%p708) target = $region72
      $region71: #{tpu_custom_call.1} parent=5 // pred_region
        %s711 = ssub.s32 %s22, 2
        // Predicated region
        $region73: #{tpu_custom_call.1} parent=71 // pred_check
          %p712 = pneg %p266
        $region74: #{tpu_custom_call.1} parent=71 // pred_check_branch
          %714 = sbr.rel (%p712) target = $region76
        $region75: #{tpu_custom_call.1} parent=71 // pred_region
          %s715 = sand.u32 %s251, 1
          %s716 = scalar_lea.sflag [#allocation4], %s715
          %s717 = sand.u32 %s251, 1
          %s718 = smul.addr %s717, 8
          %s719 = scalar_lea.vmem [#allocation3], %s718
          %721 = dma.done %s716, 128
        $region76: #{tpu_custom_call.1} parent=71 // pred_fallthru
          _
        // Predicated region
        $region77: #{tpu_custom_call.1} parent=71 // pred_check
          %p722 = pneg %p294
        $region78: #{tpu_custom_call.1} parent=71 // pred_check_branch
          %724 = sbr.rel (%p722) target = $region80
        $region79: #{tpu_custom_call.1} parent=71 // pred_region
          %s725 = sand.u32 %s279, 1
          %s726 = scalar_lea.sflag [#allocation6], %s725
          %s727 = sand.u32 %s279, 1
          %s728 = smul.addr %s727, 8
          %s729 = scalar_lea.vmem [#allocation5], %s728
          %731 = dma.done %s726, 128
        $region80: #{tpu_custom_call.1} parent=71 // pred_fallthru
          _
      $region72: #{tpu_custom_call.1} parent=5 // pred_fallthru
        _
    $region6: #{tpu_custom_call.1} parent=1 // loop_footer
      %s26 = sadd.s32 1, %s22
    $region7: #{tpu_custom_call.1} parent=1 // loop_footer_branch
      %21 = sbr.rel target = $region3
    $region8: #{tpu_custom_call.1} parent=1 // loop_exit
      _
    %732 = vsyncpa [#allocation4], 1
    %s733 = scalar_lea.sflag [#allocation4], 1
    %734 = vsyncpa %s733, 1
    %735 = vsyncpa [#allocation6], 1
    %s736 = scalar_lea.sflag [#allocation6], 1
    %737 = vsyncpa %s736, 1

</llo_original>
